<compile_context>
chip_gen: v6e
topology: v6e:2x2x1
jax: 0.10.0
libtpu: 0.0.40
codegen_flags: <defaults>
</compile_context>

<pallas_src>
import functools

import jax
import jax.numpy as jnp
from jax.experimental import pallas as pl
from jax.experimental.pallas import tpu as pltpu


def _round_up(x, m):
    return (x + m - 1) // m * m


def _pad2d(a, rows, cols):
    r, c = a.shape
    if r == rows and c == cols:
        return a
    return jnp.pad(a, ((0, rows - r), (0, cols - c)))


def _pick_tiles(m, k):
    """Lane-dense tiles sized to fit comfortably in v7x's scoped VMEM."""
    mp = _round_up(max(m, 1), 128)
    tm = 256 if mp % 256 == 0 else 128
    kp = _round_up(max(k, 1), 128)
    tk = 128
    for cand in (2048, 1024, 512, 256, 128):
        if kp % cand == 0:
            tk = cand
            break
    # worst case VMEM: 2 inputs * 2 bufs * tm*tk*4 + tgt 2*tm*tm*4 + acc tm*tm*4
    # = 8 MiB + 0.75 MiB at tm=256, tk=2048, f32 -> well under 32 MiB.
    return tm, tk, mp, kp


def _itemsize(dtype):
    return 2 if dtype == jnp.bfloat16 else 4


# --------------------------------------------------------------------------
# Tiled gram-matrix kernel (used once per style layer to build the target).
# --------------------------------------------------------------------------
def _gram_kernel(lhs_ref, rhs_ref, out_ref, acc_ref, *, inv_denom, nk):
    kk = pl.program_id(2)

    @pl.when(kk == 0)
    def _():
        acc_ref[...] = jnp.zeros_like(acc_ref)

    # Contract on K for both operands: F[i] @ F[j]^T without materializing F^T.
    acc_ref[...] += jax.lax.dot_general(
        lhs_ref[...], rhs_ref[...],
        dimension_numbers=(((1,), (1,)), ((), ())),
        preferred_element_type=jnp.float32)

    @pl.when(kk == nk - 1)
    def _():
        out_ref[...] = (acc_ref[...] * inv_denom).astype(out_ref.dtype)


def gram_matrix(x, *, matmul_dtype=jnp.float32):
    """x: (N, C, H, W) -> (N*C, N*C) float32 gram matrix (tiled Pallas kernel)."""
    n, c, h, w = x.shape
    m, k = n * c, h * w
    inv_denom = 1.0 / float(n * c * h * w)

    tm, tk, mp, kp = _pick_tiles(m, k)
    tn = tm
    feats = _pad2d(x.reshape(m, k).astype(matmul_dtype), mp, kp)
    nk = kp // tk
    grid = (mp // tm, mp // tn, nk)

    # NOTE: target gram is computed once at module construction, so we keep the
    # plain rectangular (i, j, k) grid here; symmetry skipping lives in the
    # hot-path fused loss kernel below.
    gram_p = pl.pallas_call(
        functools.partial(_gram_kernel, inv_denom=inv_denom, nk=nk),
        out_shape=jax.ShapeDtypeStruct((mp, mp), jnp.float32),
        grid_spec=pltpu.PrefetchScalarGridSpec(
            num_scalar_prefetch=0,
            grid=grid,
            in_specs=[
                pl.BlockSpec((tm, tk), lambda i, j, kk: (i, kk)),
                pl.BlockSpec((tn, tk), lambda i, j, kk: (j, kk)),
            ],
            out_specs=pl.BlockSpec((tm, tn), lambda i, j, kk: (i, j)),
            scratch_shapes=[pltpu.VMEM((tm, tn), jnp.float32)],
        ),
        compiler_params=pltpu.CompilerParams(
            dimension_semantics=("parallel", "parallel", "arbitrary"),
            vmem_limit_bytes=32 * 1024 * 1024,
        ),
        cost_estimate=pl.CostEstimate(
            flops=2 * mp * mp * kp,
            transcendentals=0,
            bytes_accessed=(grid[0] * grid[1] * nk * (tm + tn) * tk
                            * _itemsize(matmul_dtype) + mp * mp * 4),
        ),
    )(feats, feats)
    return gram_p[:m, :m]


# --------------------------------------------------------------------------
# Fused gram + MSE loss kernel, upper-triangle blocks only (symmetry).
# --------------------------------------------------------------------------
def _style_loss_kernel(bi_ref, bj_ref, lhs_ref, rhs_ref, tgt_ref, loss_ref,
                       acc_ref, sum_ref, *, inv_denom, inv_elems, nk, npairs):
    p = pl.program_id(0)    # upper-triangle block-pair index
    kk = pl.program_id(1)   # K reduction step

    @pl.when((p == 0) & (kk == 0))
    def _():
        sum_ref[0] = jnp.float32(0.0)

    @pl.when(kk == 0)
    def _():
        acc_ref[...] = jnp.zeros_like(acc_ref)

    acc_ref[...] += jax.lax.dot_general(
        lhs_ref[...], rhs_ref[...],
        dimension_numbers=(((1,), (1,)), ((), ())),
        preferred_element_type=jnp.float32)

    @pl.when(kk == nk - 1)
    def _():
        # Gram block straight from the accumulator (no VMEM round trip).
        d = acc_ref[...] * inv_denom - tgt_ref[...].astype(jnp.float32)
        # Off-diagonal blocks of the symmetric difference count twice.
        wgt = jnp.where(bi_ref[p] == bj_ref[p],
                        jnp.float32(1.0), jnp.float32(2.0))
        sum_ref[0] += wgt * jnp.sum(d * d)

    @pl.when((p == npairs - 1) & (kk == nk - 1))
    def _():
        loss_ref[0] = sum_ref[0] * inv_elems


def style_mse_loss(x, target_gram, *, matmul_dtype=jnp.float32):
    """MSE(gram_matrix(x), target_gram) fused into one tiled Pallas kernel."""
    n, c, h, w = x.shape
    m, k = n * c, h * w
    inv_denom = 1.0 / float(n * c * h * w)
    inv_elems = 1.0 / float(m * m)      # divisor stays the ORIGINAL M*M

    tm, tk, mp, kp = _pick_tiles(m, k)
    tn = tm
    feats = _pad2d(x.reshape(m, k).astype(matmul_dtype), mp, kp)
    tgt = _pad2d(target_gram.astype(jnp.float32), mp, mp)  # zero padding -> zero diff

    nb = mp // tm
    nk = kp // tk
    pairs = [(i, j) for i in range(nb) for j in range(i, nb)]
    npairs = len(pairs)
    bi = jnp.asarray([p[0] for p in pairs], dtype=jnp.int32)
    bj = jnp.asarray([p[1] for p in pairs], dtype=jnp.int32)

    kernel = functools.partial(
        _style_loss_kernel,
        inv_denom=inv_denom, inv_elems=inv_elems, nk=nk, npairs=npairs)

    loss = pl.pallas_call(
        kernel,
        out_shape=jax.ShapeDtypeStruct((1,), jnp.float32),
        grid_spec=pltpu.PrefetchScalarGridSpec(
            num_scalar_prefetch=2,      # bi, bj block lists land in SMEM
            grid=(npairs, nk),
            in_specs=[
                pl.BlockSpec((tm, tk), lambda p, kk, bi, bj: (bi[p], kk)),
                pl.BlockSpec((tn, tk), lambda p, kk, bi, bj: (bj[p], kk)),
                pl.BlockSpec((tm, tn), lambda p, kk, bi, bj: (bi[p], bj[p])),
            ],
            out_specs=pl.BlockSpec(memory_space=pltpu.SMEM),
            scratch_shapes=[
                pltpu.VMEM((tm, tn), jnp.float32),   # gram-block accumulator
                pltpu.SMEM((1,), jnp.float32),       # running squared-diff sum
            ],
        ),
        compiler_params=pltpu.CompilerParams(
            # Scalar loss is accumulated across the pair axis -> keep it
            # "arbitrary" for correctness (review's "parallel" M axes apply to
            # the independent-output gram kernel above).
            dimension_semantics=("arbitrary", "arbitrary"),
            vmem_limit_bytes=32 * 1024 * 1024,
        ),
        cost_estimate=pl.CostEstimate(
            flops=2 * npairs * tm * tn * kp,
            transcendentals=0,
            bytes_accessed=(npairs * nk * (tm + tn) * tk * _itemsize(matmul_dtype)
                            + npairs * tm * tn * 4),
        ),
    )(bi, bj, feats, feats, tgt)
    return loss[0]


class StyleLoss:
    """JAX/Pallas port of the PyTorch StyleLoss module."""

    def __init__(self, style_target, matmul_dtype=jnp.float32):
        # matmul_dtype=jnp.bfloat16 recommended on v6e/v7x (f32 accumulation kept).
        self.matmul_dtype = matmul_dtype
        # target gram computed once from the (detached) style target
        self.target = gram_matrix(style_target, matmul_dtype=matmul_dtype)
        self.mode = "create_model"
        self.loss = None

    def forward(self, x):
        if self.mode == "loss":
            self.loss = style_mse_loss(x, self.target,
                                       matmul_dtype=self.matmul_dtype)
        return x  # passthrough, identical to the PyTorch module

    __call__ = forward


if __name__ == "__main__":
    key = jax.random.PRNGKey(0)
    k1, k2 = jax.random.split(key)

    # Small shapes consistent with conv-feature inputs (NCHW)
    N, C, H, W = 2, 4, 16, 16
    style_target = jax.random.normal(k1, (N, C, H, W), dtype=jnp.float32)
    x = jax.random.normal(k2, (N, C, H, W), dtype=jnp.float32)

    def ref_gram(a, dtype=jnp.float32):
        n, c, h, w = a.shape
        f = a.reshape(n * c, h * w).astype(dtype)
        g = jax.lax.dot_general(f, f,
                                dimension_numbers=(((1,), (1,)), ((), ())),
                                preferred_element_type=jnp.float32)
        return g / float(n * c * h * w)

    # ---- f32 matmul path: exact check against plain-JAX reference ----
    mod = StyleLoss(style_target)

    y = mod(x)                      # 'create_model' mode: pure passthrough
    jax.block_until_ready(y)
    assert jnp.array_equal(y, x)

    g_ref = ref_gram(style_target)
    assert jnp.allclose(mod.target, g_ref, rtol=1e-5, atol=1e-6)

    mod.mode = "loss"
    y = mod(x)
    jax.block_until_ready(y)
    loss = jax.block_until_ready(mod.loss)
    ref_loss = jnp.mean((ref_gram(x) - g_ref) ** 2)
    assert jnp.allclose(loss, ref_loss, rtol=1e-5, atol=1e-7), (loss, ref_loss)

    # ---- bf16 matmul path (v6e/v7x MXU-rate optimization), relaxed check ----
    mod_bf16 = StyleLoss(style_target, matmul_dtype=jnp.bfloat16)
    mod_bf16.mode = "loss"
    jax.block_until_ready(mod_bf16(x))
    loss_bf16 = jax.block_until_ready(mod_bf16.loss)
    ref_loss_bf16 = jnp.mean(
        (ref_gram(x, jnp.bfloat16) - ref_gram(style_target, jnp.bfloat16)) ** 2)
    assert jnp.allclose(loss_bf16, ref_loss_bf16, rtol=1e-2, atol=1e-6), (
        loss_bf16, ref_loss_bf16)

    print("KERNEL_OK")
</pallas_src>

<mosaic_0001>
module attributes {stable_mosaic.version = 11 : i64} {
  func.func @_gram_kernel(%arg0: i32, %arg1: i32, %arg2: i32, %arg3: memref<128x256xf32, #tpu.memory_space<vmem>>, %arg4: memref<128x256xf32, #tpu.memory_space<vmem>>, %arg5: memref<128x128xf32, #tpu.memory_space<vmem>>, %arg6: memref<128x128xf32, #tpu.memory_space<vmem>>) attributes {dimension_semantics = [#tpu.dimension_semantics<parallel>, #tpu.dimension_semantics<parallel>, #tpu.dimension_semantics<arbitrary>], iteration_bounds = array<i64: 1, 1, 1>, scalar_prefetch = 0 : i64, scratch_operands = 1 : i64, tpu.core_type = #tpu.core_type<tc>, window_params = [{transform_indices = @transform_0, window_bounds = array<i64: 128, 256>}, {transform_indices = @transform_1, window_bounds = array<i64: 128, 256>}, {transform_indices = @transform_2, window_bounds = array<i64: 128, 128>}]} {
    %c0_i32 = arith.constant 0 : i32
    %0 = arith.cmpi eq, %arg2, %c0_i32 : i32
    %1 = arith.extui %0 : i1 to i32
    %c0_i32_0 = arith.constant 0 : i32
    %2 = arith.cmpi ne, %1, %c0_i32_0 : i32
    scf.if %2 {
      %cst_10 = arith.constant 0.000000e+00 : f32
      %12 = vector.broadcast %cst_10 : f32 to vector<128x128xf32>
      %c0_11 = arith.constant 0 : index
      %c0_12 = arith.constant 0 : index
      %13 = vector.load %arg6[%c0_11, %c0_12] : memref<128x128xf32, #tpu.memory_space<vmem>>, vector<128x128xf32>
      tpu.vector_store %arg6[%c0_11, %c0_12], %12 {strides = array<i32>} : memref<128x128xf32, #tpu.memory_space<vmem>>, vector<128x128xf32>,
    } else {
    }
    %c0 = arith.constant 0 : index
    %c0_1 = arith.constant 0 : index
    %3 = vector.load %arg6[%c0, %c0_1] : memref<128x128xf32, #tpu.memory_space<vmem>>, vector<128x128xf32>
    %c0_2 = arith.constant 0 : index
    %c0_3 = arith.constant 0 : index
    %4 = vector.load %arg3[%c0_2, %c0_3] : memref<128x256xf32, #tpu.memory_space<vmem>>, vector<128x256xf32>
    %c0_4 = arith.constant 0 : index
    %c0_5 = arith.constant 0 : index
    %5 = vector.load %arg4[%c0_4, %c0_5] : memref<128x256xf32, #tpu.memory_space<vmem>>, vector<128x256xf32>
    %cst = arith.constant dense<0.000000e+00> : vector<128x128xf32>
    %6 = tpu.matmul %4, %5, %cst {dimension_numbers = #tpu.dot_dimension_numbers<[1], [1], [0], [0], [0, 0, 1, 0], [], []>} : vector<128x256xf32>, vector<128x256xf32>, vector<128x128xf32> -> vector<128x128xf32>
    %7 = arith.addf %3, %6 : vector<128x128xf32>
    %c0_6 = arith.constant 0 : index
    %c0_7 = arith.constant 0 : index
    %8 = vector.load %arg6[%c0_6, %c0_7] : memref<128x128xf32, #tpu.memory_space<vmem>>, vector<128x128xf32>
    tpu.vector_store %arg6[%c0_6, %c0_7], %7 {strides = array<i32>} : memref<128x128xf32, #tpu.memory_space<vmem>>, vector<128x128xf32>,
    %c0_i32_8 = arith.constant 0 : i32
    %9 = arith.cmpi eq, %arg2, %c0_i32_8 : i32
    %10 = arith.extui %9 : i1 to i32
    %c0_i32_9 = arith.constant 0 : i32
    %11 = arith.cmpi ne, %10, %c0_i32_9 : i32
    scf.if %11 {
      %c0_10 = arith.constant 0 : index
      %c0_11 = arith.constant 0 : index
      %12 = vector.load %arg6[%c0_10, %c0_11] : memref<128x128xf32, #tpu.memory_space<vmem>>, vector<128x128xf32>
      %cst_12 = arith.constant 4.8828125E-4 : f32
      %13 = vector.broadcast %cst_12 : f32 to vector<128x128xf32>
      %14 = arith.mulf %12, %13 : vector<128x128xf32>
      %c0_13 = arith.constant 0 : index
      %c0_14 = arith.constant 0 : index
      %15 = vector.load %arg5[%c0_13, %c0_14] : memref<128x128xf32, #tpu.memory_space<vmem>>, vector<128x128xf32>
      tpu.vector_store %arg5[%c0_13, %c0_14], %14 {strides = array<i32>} : memref<128x128xf32, #tpu.memory_space<vmem>>, vector<128x128xf32>,
    } else {
    }
    return
  }
  func.func @transform_0(%arg0: i32, %arg1: i32, %arg2: i32) -> (i32, i32) {
    %c0_i32 = arith.constant 0 : i32
    return %arg0, %arg2 : i32, i32
  }
  func.func @transform_1(%arg0: i32, %arg1: i32, %arg2: i32) -> (i32, i32) {
    %c0_i32 = arith.constant 0 : i32
    return %arg1, %arg2 : i32, i32
  }
  func.func @transform_2(%arg0: i32, %arg1: i32, %arg2: i32) -> (i32, i32) {
    %c0_i32 = arith.constant 0 : i32
    return %arg0, %arg1 : i32, i32
  }
}

</mosaic_0001>

<llo_original>
// kernel: tpu_custom_call.1
$region0: #{tpu_custom_call.1}
  #allocation0 [shape = 'u32[]', space=smem, size = 0x4, offset = 0x4, fixed_abs, tag = 'smem constant byte address 0x4 - core index']
  #allocation1 [shape = 'u32[144,128]{1,0:T(1,128)}', space=vmem, size = 0x12000, scoped, tag = 'internal scratch']
  #allocation2 [shape = 'f32[128,128]{1,0:T(8,128)}', space=vmem, size = 0x10000, scoped, tag = 'scratch operand']
  %s0 = inlined_call_operand.hbm [shape: f32[128,256], index: 0, kind: input, shape index: {}]
  %s1 = inlined_call_operand.hbm [shape: f32[128,256], index: 1, kind: input, shape index: {}]
  %s2 = inlined_call_operand.hbm [shape: f32[128,128], index: 2, kind: output, shape index: {}]
  %s3 = sld [smem:[#allocation0]]
  $region34: #{tpu_custom_call.1} parent=0
    _
  %s5 = ssub.s32 1, %s3
  %s6 = scalar_select 0, %s5, %s3
  $region1: #{tpu_custom_call.1} parent=0
    #allocation3 [shape = 'u8[131072]{0}', space=vmem, size = 0x20000, scoped, tag = 'input window, operand 0, single buffered']
    #allocation4 [shape = 's32[1]{0}', space=sflag, size = 0x4, scoped, tag = 'scoped memory for tpu_custom_call.1']
    #allocation5 [shape = 's32[1]{0}', space=sflag, size = 0x4, scoped, tag = 'scoped memory for tpu_custom_call.1']
    #allocation6 [shape = 'u8[131072]{0}', space=vmem, size = 0x20000, scoped, tag = 'input window, operand 1, single buffered']
    #allocation7 [shape = 's32[1]{0}', space=sflag, size = 0x4, scoped, tag = 'scoped memory for tpu_custom_call.1']
    #allocation8 [shape = 'u8[65536]{0}', space=vmem, size = 0x10000, scoped, tag = 'output window, operand 0, single buffered']
    %7 = vsyncpa [#allocation4], 0
    %8 = vsyncpa [#allocation7], 0
    %9 = vsyncpa [#allocation5], 0
    // Predicated region
    $region2: #{tpu_custom_call.1} parent=1 // pred_check
      _
    $region3: #{tpu_custom_call.1} parent=1 // pred_check_branch
      %11 = sbr.rel (0) target = $region5
    $region4: #{tpu_custom_call.1} parent=1 // pred_region
      %s13 = ssub.s32 4096, 4096
      %14 = vsyncadd [#allocation4], %s13
      %s15 = sshll.u32 [#allocation3], 4
      %s16 = int_to_ptr.vmem [resolvable:$true] %s15
      %21 = dma.hbm_to_vmem [thread:$0]  %s0, 4096, %s16, [#allocation4], 256, 256, 16
    $region5: #{tpu_custom_call.1} parent=1 // pred_fallthru
      _
    // Predicated region
    $region6: #{tpu_custom_call.1} parent=1 // pred_check
      _
    $region7: #{tpu_custom_call.1} parent=1 // pred_check_branch
      %23 = sbr.rel (0) target = $region9
    $region8: #{tpu_custom_call.1} parent=1 // pred_region
      %s25 = ssub.s32 4096, 4096
      %26 = vsyncadd [#allocation7], %s25
      %s27 = sshll.u32 [#allocation6], 4
      %s28 = int_to_ptr.vmem [resolvable:$true] %s27
      %33 = dma.hbm_to_vmem [thread:$0]  %s1, 4096, %s28, [#allocation7], 256, 256, 16
    $region9: #{tpu_custom_call.1} parent=1 // pred_fallthru
      _
    // Predicated region
    $region10: #{tpu_custom_call.1} parent=1 // pred_check
      _
    $region11: #{tpu_custom_call.1} parent=1 // pred_check_branch
      %35 = sbr.rel (0) target = $region13
    $region12: #{tpu_custom_call.1} parent=1 // pred_region
      %36 = dma.done [#allocation4], 4096
    $region13: #{tpu_custom_call.1} parent=1 // pred_fallthru
      _
    // Predicated region
    $region14: #{tpu_custom_call.1} parent=1 // pred_check
      _
    $region15: #{tpu_custom_call.1} parent=1 // pred_check_branch
      %38 = sbr.rel (0) target = $region17
    $region16: #{tpu_custom_call.1} parent=1 // pred_region
      %39 = dma.done [#allocation7], 4096
    $region17: #{tpu_custom_call.1} parent=1 // pred_fallthru
      _
    %p40 = scmp.eq.s32.totalorder 0, 0
    // Predicated region
    $region18: #{tpu_custom_call.1} parent=1 // pred_check
      %p41 = pneg %p40
    $region19: #{tpu_custom_call.1} parent=1 // pred_check_branch
      %43 = sbr.rel (%p41) target = $region21
    $region20: #{tpu_custom_call.1} parent=1 // pred_region
      %44 = vst [vmem:[#allocation2] sm:$0xff] 0.0
      %45 = vst [vmem:[#allocation2 + $0x8] sm:$0xff] 0.0
      %46 = vst [vmem:[#allocation2 + $0x10] sm:$0xff] 0.0
      %47 = vst [vmem:[#allocation2 + $0x18] sm:$0xff] 0.0
      %48 = vst [vmem:[#allocation2 + $0x20] sm:$0xff] 0.0
      %49 = vst [vmem:[#allocation2 + $0x28] sm:$0xff] 0.0
      %50 = vst [vmem:[#allocation2 + $0x30] sm:$0xff] 0.0
      %51 = vst [vmem:[#allocation2 + $0x38] sm:$0xff] 0.0
      %52 = vst [vmem:[#allocation2 + $0x40] sm:$0xff] 0.0
      %53 = vst [vmem:[#allocation2 + $0x48] sm:$0xff] 0.0
      %54 = vst [vmem:[#allocation2 + $0x50] sm:$0xff] 0.0
      %55 = vst [vmem:[#allocation2 + $0x58] sm:$0xff] 0.0
      %56 = vst [vmem:[#allocation2 + $0x60] sm:$0xff] 0.0
      %57 = vst [vmem:[#allocation2 + $0x68] sm:$0xff] 0.0
      %58 = vst [vmem:[#allocation2 + $0x70] sm:$0xff] 0.0
      %59 = vst [vmem:[#allocation2 + $0x78] sm:$0xff] 0.0
    $region21: #{tpu_custom_call.1} parent=1 // pred_fallthru
      _
    %v60 = vld [vmem:[#allocation2] sm:$0xff]
    %v61 = vld [vmem:[#allocation2 + $0x8] sm:$0xff]
    %v62 = vld [vmem:[#allocation2 + $0x10] sm:$0xff]
    %v63 = vld [vmem:[#allocation2 + $0x18] sm:$0xff]
    %v64 = vld [vmem:[#allocation2 + $0x20] sm:$0xff]
    %v65 = vld [vmem:[#allocation2 + $0x28] sm:$0xff]
    %v66 = vld [vmem:[#allocation2 + $0x30] sm:$0xff]
    %v67 = vld [vmem:[#allocation2 + $0x38] sm:$0xff]
    %v68 = vld [vmem:[#allocation2 + $0x40] sm:$0xff]
    %v69 = vld [vmem:[#allocation2 + $0x48] sm:$0xff]
    %v70 = vld [vmem:[#allocation2 + $0x50] sm:$0xff]
    %v71 = vld [vmem:[#allocation2 + $0x58] sm:$0xff]
    %v72 = vld [vmem:[#allocation2 + $0x60] sm:$0xff]
    %v73 = vld [vmem:[#allocation2 + $0x68] sm:$0xff]
    %v74 = vld [vmem:[#allocation2 + $0x70] sm:$0xff]
    %v75 = vld [vmem:[#allocation2 + $0x78] sm:$0xff]
    %v76 = vld [vmem:[#allocation3] sm:$0xff]
    %v77 = vld [vmem:[#allocation3 + $0x8] sm:$0xff]
    %v78 = vld [vmem:[#allocation3 + $0x10] sm:$0xff]
    %v79 = vld [vmem:[#allocation3 + $0x18] sm:$0xff]
    %v80 = vld [vmem:[#allocation3 + $0x20] sm:$0xff]
    %v81 = vld [vmem:[#allocation3 + $0x28] sm:$0xff]
    %v82 = vld [vmem:[#allocation3 + $0x30] sm:$0xff]
    %v83 = vld [vmem:[#allocation3 + $0x38] sm:$0xff]
    %v84 = vld [vmem:[#allocation3 + $0x40] sm:$0xff]
    %v85 = vld [vmem:[#allocation3 + $0x48] sm:$0xff]
    %v86 = vld [vmem:[#allocation3 + $0x50] sm:$0xff]
    %v87 = vld [vmem:[#allocation3 + $0x58] sm:$0xff]
    %v88 = vld [vmem:[#allocation3 + $0x60] sm:$0xff]
    %v89 = vld [vmem:[#allocation3 + $0x68] sm:$0xff]
    %v90 = vld [vmem:[#allocation3 + $0x70] sm:$0xff]
    %v91 = vld [vmem:[#allocation3 + $0x78] sm:$0xff]
    %v92 = vld [vmem:[#allocation3 + $0x80] sm:$0xff]
    %v93 = vld [vmem:[#allocation3 + $0x88] sm:$0xff]
    %v94 = vld [vmem:[#allocation3 + $0x90] sm:$0xff]
    %v95 = vld [vmem:[#allocation3 + $0x98] sm:$0xff]
    %v96 = vld [vmem:[#allocation3 + $0xa0] sm:$0xff]
    %v97 = vld [vmem:[#allocation3 + $0xa8] sm:$0xff]
    %v98 = vld [vmem:[#allocation3 + $0xb0] sm:$0xff]
    %v99 = vld [vmem:[#allocation3 + $0xb8] sm:$0xff]
    %v100 = vld [vmem:[#allocation3 + $0xc0] sm:$0xff]
    %v101 = vld [vmem:[#allocation3 + $0xc8] sm:$0xff]
    %v102 = vld [vmem:[#allocation3 + $0xd0] sm:$0xff]
    %v103 = vld [vmem:[#allocation3 + $0xd8] sm:$0xff]
    %v104 = vld [vmem:[#allocation3 + $0xe0] sm:$0xff]
    %v105 = vld [vmem:[#allocation3 + $0xe8] sm:$0xff]
    %v106 = vld [vmem:[#allocation3 + $0xf0] sm:$0xff]
    %v107 = vld [vmem:[#allocation3 + $0xf8] sm:$0xff]
    %v108 = vld [vmem:[#allocation6] sm:$0xff]
    %v109 = vld [vmem:[#allocation6 + $0x8] sm:$0xff]
    %v110 = vld [vmem:[#allocation6 + $0x10] sm:$0xff]
    %v111 = vld [vmem:[#allocation6 + $0x18] sm:$0xff]
    %v112 = vld [vmem:[#allocation6 + $0x20] sm:$0xff]
    %v113 = vld [vmem:[#allocation6 + $0x28] sm:$0xff]
    %v114 = vld [vmem:[#allocation6 + $0x30] sm:$0xff]
    %v115 = vld [vmem:[#allocation6 + $0x38] sm:$0xff]
    %v116 = vld [vmem:[#allocation6 + $0x40] sm:$0xff]
    %v117 = vld [vmem:[#allocation6 + $0x48] sm:$0xff]
    %v118 = vld [vmem:[#allocation6 + $0x50] sm:$0xff]
    %v119 = vld [vmem:[#allocation6 + $0x58] sm:$0xff]
    %v120 = vld [vmem:[#allocation6 + $0x60] sm:$0xff]
    %v121 = vld [vmem:[#allocation6 + $0x68] sm:$0xff]
    %v122 = vld [vmem:[#allocation6 + $0x70] sm:$0xff]
    %v123 = vld [vmem:[#allocation6 + $0x78] sm:$0xff]
    %v124 = vld [vmem:[#allocation6 + $0x80] sm:$0xff]
    %v125 = vld [vmem:[#allocation6 + $0x88] sm:$0xff]
    %v126 = vld [vmem:[#allocation6 + $0x90] sm:$0xff]
    %v127 = vld [vmem:[#allocation6 + $0x98] sm:$0xff]
    %v128 = vld [vmem:[#allocation6 + $0xa0] sm:$0xff]
    %v129 = vld [vmem:[#allocation6 + $0xa8] sm:$0xff]
    %v130 = vld [vmem:[#allocation6 + $0xb0] sm:$0xff]
    %v131 = vld [vmem:[#allocation6 + $0xb8] sm:$0xff]
    %v132 = vld [vmem:[#allocation6 + $0xc0] sm:$0xff]
    %v133 = vld [vmem:[#allocation6 + $0xc8] sm:$0xff]
    %v134 = vld [vmem:[#allocation6 + $0xd0] sm:$0xff]
    %v135 = vld [vmem:[#allocation6 + $0xd8] sm:$0xff]
    %v136 = vld [vmem:[#allocation6 + $0xe0] sm:$0xff]
    %v137 = vld [vmem:[#allocation6 + $0xe8] sm:$0xff]
    %v138 = vld [vmem:[#allocation6 + $0xf0] sm:$0xff]
    %v139 = vld [vmem:[#allocation6 + $0xf8] sm:$0xff]
    %140 = vmatprep.subr.mxu0 %v139
    %141 = vmatpush1.xpose.msra.mxu0 %v138
    %142 = vmatprep.subr.mxu0 %v137
    %143 = vmatpush1.xpose.msra.mxu0 %v136
    %144 = vmatprep.subr.mxu0 %v135
    %145 = vmatpush1.xpose.msra.mxu0 %v134
    %146 = vmatprep.subr.mxu0 %v133
    %147 = vmatpush1.xpose.msra.mxu0 %v132
    %148 = vmatprep.subr.mxu0 %v131
    %149 = vmatpush1.xpose.msra.mxu0 %v130
    %150 = vmatprep.subr.mxu0 %v129
    %151 = vmatpush1.xpose.msra.mxu0 %v128
    %152 = vmatprep.subr.mxu0 %v127
    %153 = vmatpush1.xpose.msra.mxu0 %v126
    %154 = vmatprep.subr.mxu0 %v125
    %155 = vmatpush1.xpose.msra.mxu0 %v124
    %156 = vmatprep.subr.mxu0 %v123
    %157 = vmatpush1.xpose.msra.mxu0 %v122
    %158 = vmatprep.subr.mxu0 %v121
    %159 = vmatpush1.xpose.msra.mxu0 %v120
    %160 = vmatprep.subr.mxu0 %v119
    %161 = vmatpush1.xpose.msra.mxu0 %v118
    %162 = vmatprep.subr.mxu0 %v117
    %163 = vmatpush1.xpose.msra.mxu0 %v116
    %164 = vmatprep.subr.mxu0 %v115
    %165 = vmatpush1.xpose.msra.mxu0 %v114
    %166 = vmatprep.subr.mxu0 %v113
    %167 = vmatpush1.xpose.msra.mxu0 %v112
    %168 = vmatprep.subr.mxu0 %v111
    %169 = vmatpush1.xpose.msra.mxu0 %v110
    %170 = vmatprep.subr.mxu0 %v109
    %171 = vmatpush1.xpose.msra.mxu0 %v108
    %172 = vmatprep.subr.mxu0 0.0
    %173 = vmatpush2.xpose.msra.mxu0 0.0
    %174 = vmatprep.subr.mxu0 0.0
    %175 = vmatpush2.xpose.msra.mxu0 0.0
    %176 = vmatprep.subr.mxu0 0.0
    %177 = vmatpush2.xpose.msra.mxu0 0.0
    %178 = vmatprep.subr.mxu0 0.0
    %179 = vmatpush2.xpose.msra.mxu0 0.0
    %180 = vmatprep.subr.mxu0 0.0
    %181 = vmatpush2.xpose.msra.mxu0 0.0
    %182 = vmatprep.subr.mxu0 0.0
    %183 = vmatpush2.xpose.msra.mxu0 0.0
    %184 = vmatprep.subr.mxu0 0.0
    %185 = vmatpush2.xpose.msra.mxu0 0.0
    %186 = vmatprep.subr.mxu0 0.0
    %187 = vmatpush2.xpose.msra.mxu0 0.0
    %188 = vmatprep.subr.mxu0 0.0
    %189 = vmatpush2.xpose.msra.mxu0 0.0
    %190 = vmatprep.subr.mxu0 0.0
    %191 = vmatpush2.xpose.msra.mxu0 0.0
    %192 = vmatprep.subr.mxu0 0.0
    %193 = vmatpush2.xpose.msra.mxu0 0.0
    %194 = vmatprep.subr.mxu0 0.0
    %195 = vmatpush2.xpose.msra.mxu0 0.0
    %196 = vmatprep.subr.mxu0 0.0
    %197 = vmatpush2.xpose.msra.mxu0 0.0
    %198 = vmatprep.subr.mxu0 0.0
    %199 = vmatpush2.xpose.msra.mxu0 0.0
    %200 = vmatprep.subr.mxu0 0.0
    %201 = vmatpush2.xpose.msra.mxu0 0.0
    %202 = vmatprep.subr.mxu0 0.0
    %203 = vmatpush2.xpose.msra.mxu0 0.0
    %204 = vmatprep.mubr.f32.mxu0 %v77
    %205 = vmatmul.mubr.f32.gmra.mxu0 %v76
    %v206 = vpop.f32.mrf.mxu0
    %v207 = vadd.f32 0.0, %v206
    %v208 = vpop.f32.mrf.mxu0
    %209 = vmatprep.mubr.f32.mxu0 %v79
    %210 = vmatmul.mubr.f32.gmra.mxu0 %v78
    %v211 = vpop.f32.mrf.mxu0
    %v212 = vadd.f32 0.0, %v211
    %v213 = vpop.f32.mrf.mxu0
    %214 = vmatprep.mubr.f32.mxu0 %v81
    %215 = vmatmul.mubr.f32.gmra.mxu0 %v80
    %v216 = vpop.f32.mrf.mxu0
    %v217 = vadd.f32 0.0, %v216
    %v218 = vpop.f32.mrf.mxu0
    %219 = vmatprep.mubr.f32.mxu0 %v83
    %220 = vmatmul.mubr.f32.gmra.mxu0 %v82
    %v221 = vpop.f32.mrf.mxu0
    %v222 = vadd.f32 0.0, %v221
    %v223 = vpop.f32.mrf.mxu0
    %224 = vmatprep.mubr.f32.mxu0 %v85
    %225 = vmatmul.mubr.f32.gmra.mxu0 %v84
    %v226 = vpop.f32.mrf.mxu0
    %v227 = vadd.f32 0.0, %v226
    %v228 = vpop.f32.mrf.mxu0
    %229 = vmatprep.mubr.f32.mxu0 %v87
    %230 = vmatmul.mubr.f32.gmra.mxu0 %v86
    %v231 = vpop.f32.mrf.mxu0
    %v232 = vadd.f32 0.0, %v231
    %v233 = vpop.f32.mrf.mxu0
    %234 = vmatprep.mubr.f32.mxu0 %v89
    %235 = vmatmul.mubr.f32.gmra.mxu0 %v88
    %v236 = vpop.f32.mrf.mxu0
    %v237 = vadd.f32 0.0, %v236
    %v238 = vpop.f32.mrf.mxu0
    %239 = vmatprep.mubr.f32.mxu0 %v91
    %240 = vmatmul.mubr.f32.gmra.mxu0 %v90
    %v241 = vpop.f32.mrf.mxu0
    %v242 = vadd.f32 0.0, %v241
    %v243 = vpop.f32.mrf.mxu0
    %244 = vmatprep.mubr.f32.mxu0 %v93
    %245 = vmatmul.mubr.f32.gmra.mxu0 %v92
    %v246 = vpop.f32.mrf.mxu0
    %v247 = vadd.f32 0.0, %v246
    %v248 = vpop.f32.mrf.mxu0
    %249 = vmatprep.mubr.f32.mxu0 %v95
    %250 = vmatmul.mubr.f32.gmra.mxu0 %v94
    %v251 = vpop.f32.mrf.mxu0
    %v252 = vadd.f32 0.0, %v251
    %v253 = vpop.f32.mrf.mxu0
    %254 = vmatprep.mubr.f32.mxu0 %v97
    %255 = vmatmul.mubr.f32.gmra.mxu0 %v96
    %v256 = vpop.f32.mrf.mxu0
    %v257 = vadd.f32 0.0, %v256
    %v258 = vpop.f32.mrf.mxu0
    %259 = vmatprep.mubr.f32.mxu0 %v99
    %260 = vmatmul.mubr.f32.gmra.mxu0 %v98
    %v261 = vpop.f32.mrf.mxu0
    %v262 = vadd.f32 0.0, %v261
    %v263 = vpop.f32.mrf.mxu0
    %264 = vmatprep.mubr.f32.mxu0 %v101
    %265 = vmatmul.mubr.f32.gmra.mxu0 %v100
    %v266 = vpop.f32.mrf.mxu0
    %v267 = vadd.f32 0.0, %v266
    %v268 = vpop.f32.mrf.mxu0
    %269 = vmatprep.mubr.f32.mxu0 %v103
    %270 = vmatmul.mubr.f32.gmra.mxu0 %v102
    %v271 = vpop.f32.mrf.mxu0
    %v272 = vadd.f32 0.0, %v271
    %v273 = vpop.f32.mrf.mxu0
    %274 = vmatprep.mubr.f32.mxu0 %v105
    %275 = vmatmul.mubr.f32.gmra.mxu0 %v104
    %v276 = vpop.f32.mrf.mxu0
    %v277 = vadd.f32 0.0, %v276
    %v278 = vpop.f32.mrf.mxu0
    %279 = vmatprep.mubr.f32.mxu0 %v107
    %280 = vmatmul.mubr.f32.gmra.mxu0 %v106
    %v281 = vpop.f32.mrf.mxu0
    %v282 = vadd.f32 0.0, %v281
    %v283 = vpop.f32.mrf.mxu0
    %284 = vdwg.mxu0
    %v285 = vadd.f32 %v60, %v207
    %v286 = vadd.f32 %v61, %v212
    %v287 = vadd.f32 %v62, %v217
    %v288 = vadd.f32 %v63, %v222
    %v289 = vadd.f32 %v64, %v227
    %v290 = vadd.f32 %v65, %v232
    %v291 = vadd.f32 %v66, %v237
    %v292 = vadd.f32 %v67, %v242
    %v293 = vadd.f32 %v68, %v247
    %v294 = vadd.f32 %v69, %v252
    %v295 = vadd.f32 %v70, %v257
    %v296 = vadd.f32 %v71, %v262
    %v297 = vadd.f32 %v72, %v267
    %v298 = vadd.f32 %v73, %v272
    %v299 = vadd.f32 %v74, %v277
    %v300 = vadd.f32 %v75, %v282
    %301 = vst [vmem:[#allocation2] sm:$0xff] %v285
    %302 = vst [vmem:[#allocation2 + $0x8] sm:$0xff] %v286
    %303 = vst [vmem:[#allocation2 + $0x10] sm:$0xff] %v287
    %304 = vst [vmem:[#allocation2 + $0x18] sm:$0xff] %v288
    %305 = vst [vmem:[#allocation2 + $0x20] sm:$0xff] %v289
    %306 = vst [vmem:[#allocation2 + $0x28] sm:$0xff] %v290
    %307 = vst [vmem:[#allocation2 + $0x30] sm:$0xff] %v291
    %308 = vst [vmem:[#allocation2 + $0x38] sm:$0xff] %v292
    %309 = vst [vmem:[#allocation2 + $0x40] sm:$0xff] %v293
    %310 = vst [vmem:[#allocation2 + $0x48] sm:$0xff] %v294
    %311 = vst [vmem:[#allocation2 + $0x50] sm:$0xff] %v295
    %312 = vst [vmem:[#allocation2 + $0x58] sm:$0xff] %v296
    %313 = vst [vmem:[#allocation2 + $0x60] sm:$0xff] %v297
    %314 = vst [vmem:[#allocation2 + $0x68] sm:$0xff] %v298
    %315 = vst [vmem:[#allocation2 + $0x70] sm:$0xff] %v299
    %316 = vst [vmem:[#allocation2 + $0x78] sm:$0xff] %v300
    // Predicated region
    $region22: #{tpu_custom_call.1} parent=1 // pred_check
      %p317 = pneg %p40
    $region23: #{tpu_custom_call.1} parent=1 // pred_check_branch
      %319 = sbr.rel (%p317) target = $region25
    $region24: #{tpu_custom_call.1} parent=1 // pred_region
      %v320 = vld [vmem:[#allocation2] sm:$0xff]
      %v321 = vld [vmem:[#allocation2 + $0x8] sm:$0xff]
      %v322 = vld [vmem:[#allocation2 + $0x10] sm:$0xff]
      %v323 = vld [vmem:[#allocation2 + $0x18] sm:$0xff]
      %v324 = vld [vmem:[#allocation2 + $0x20] sm:$0xff]
      %v325 = vld [vmem:[#allocation2 + $0x28] sm:$0xff]
      %v326 = vld [vmem:[#allocation2 + $0x30] sm:$0xff]
      %v327 = vld [vmem:[#allocation2 + $0x38] sm:$0xff]
      %v328 = vld [vmem:[#allocation2 + $0x40] sm:$0xff]
      %v329 = vld [vmem:[#allocation2 + $0x48] sm:$0xff]
      %v330 = vld [vmem:[#allocation2 + $0x50] sm:$0xff]
      %v331 = vld [vmem:[#allocation2 + $0x58] sm:$0xff]
      %v332 = vld [vmem:[#allocation2 + $0x60] sm:$0xff]
      %v333 = vld [vmem:[#allocation2 + $0x68] sm:$0xff]
      %v334 = vld [vmem:[#allocation2 + $0x70] sm:$0xff]
      %v335 = vld [vmem:[#allocation2 + $0x78] sm:$0xff]
      %v336 = vmul.f32 %v320, 0.00048828125
      %v337 = vmul.f32 %v321, 0.00048828125
      %v338 = vmul.f32 %v322, 0.00048828125
      %v339 = vmul.f32 %v323, 0.00048828125
      %v340 = vmul.f32 %v324, 0.00048828125
      %v341 = vmul.f32 %v325, 0.00048828125
      %v342 = vmul.f32 %v326, 0.00048828125
      %v343 = vmul.f32 %v327, 0.00048828125
      %v344 = vmul.f32 %v328, 0.00048828125
      %v345 = vmul.f32 %v329, 0.00048828125
      %v346 = vmul.f32 %v330, 0.00048828125
      %v347 = vmul.f32 %v331, 0.00048828125
      %v348 = vmul.f32 %v332, 0.00048828125
      %v349 = vmul.f32 %v333, 0.00048828125
      %v350 = vmul.f32 %v334, 0.00048828125
      %v351 = vmul.f32 %v335, 0.00048828125
      %352 = vst [vmem:[#allocation8] sm:$0xff] %v336
      %353 = vst [vmem:[#allocation8 + $0x8] sm:$0xff] %v337
      %354 = vst [vmem:[#allocation8 + $0x10] sm:$0xff] %v338
      %355 = vst [vmem:[#allocation8 + $0x18] sm:$0xff] %v339
      %356 = vst [vmem:[#allocation8 + $0x20] sm:$0xff] %v340
      %357 = vst [vmem:[#allocation8 + $0x28] sm:$0xff] %v341
      %358 = vst [vmem:[#allocation8 + $0x30] sm:$0xff] %v342
      %359 = vst [vmem:[#allocation8 + $0x38] sm:$0xff] %v343
      %360 = vst [vmem:[#allocation8 + $0x40] sm:$0xff] %v344
      %361 = vst [vmem:[#allocation8 + $0x48] sm:$0xff] %v345
      %362 = vst [vmem:[#allocation8 + $0x50] sm:$0xff] %v346
      %363 = vst [vmem:[#allocation8 + $0x58] sm:$0xff] %v347
      %364 = vst [vmem:[#allocation8 + $0x60] sm:$0xff] %v348
      %365 = vst [vmem:[#allocation8 + $0x68] sm:$0xff] %v349
      %366 = vst [vmem:[#allocation8 + $0x70] sm:$0xff] %v350
      %367 = vst [vmem:[#allocation8 + $0x78] sm:$0xff] %v351
    $region25: #{tpu_custom_call.1} parent=1 // pred_fallthru
      _
    // Predicated region
    $region26: #{tpu_custom_call.1} parent=1 // pred_check
      _
    $region27: #{tpu_custom_call.1} parent=1 // pred_check_branch
      %369 = sbr.rel (0) target = $region29
    $region28: #{tpu_custom_call.1} parent=1 // pred_region
      %s371 = ssub.s32 2048, 2048
      %372 = vsyncadd [#allocation5], %s371
      %s373 = sshll.u32 [#allocation8], 4
      %s374 = int_to_ptr.vmem [resolvable:$true] %s373
      %379 = dma.vmem_to_hbm [thread:$0]  %s374, 2048, %s2, [#allocation5], 128, 128, 8
    $region29: #{tpu_custom_call.1} parent=1 // pred_fallthru
      _
    // Predicated region
    $region30: #{tpu_custom_call.1} parent=1 // pred_check
      _
    $region31: #{tpu_custom_call.1} parent=1 // pred_check_branch
      %381 = sbr.rel (0) target = $region33
    $region32: #{tpu_custom_call.1} parent=1 // pred_region
      %382 = dma.done [#allocation5], 2048
    $region33: #{tpu_custom_call.1} parent=1 // pred_fallthru
      _
    %383 = vsyncpa [#allocation4], 1
    %384 = vsyncpa [#allocation7], 1
    %385 = vsyncpa [#allocation5], 1

</llo_original>
